<compile_context>
chip_gen: v6e
topology: v6e:2x2x1
jax: 0.10.0
libtpu: 0.0.40
codegen_flags: <defaults>
</compile_context>

<pallas_src>
import functools
import math

import jax
import jax.numpy as jnp
from jax.experimental import pallas as pl
from jax.experimental.pallas import tpu as pltpu  # noqa: F401  (not needed for this tiny kernel)


def _gelu_exact(x):
    # nn.GELU() default: exact erf-based GELU (matches PyTorch numerics)
    return 0.5 * x * (1.0 + jax.lax.erf(x / jnp.sqrt(2.0).astype(x.dtype)))


def spectral_filter_kernel(x_ref, small_ref, big_ref, out_ref, *,
                           b, hw, c, dq, dk, hidden1):
    f32 = jnp.float32

    x = x_ref[...]                                   # [b*hw, c]  f32
    small = small_ref[...]                           # [32, 128]  packed constants
    wqk = small[0:c, 0:dq + dk]                      # [c, dq+dk]
    w1a = small[c:c + dk, 0:hidden1]                 # [dk, hidden1]
    b1a = small[c + dk:c + dk + 1, 0:hidden1]        # [1, hidden1]
    b12 = small[c + dk + 1:c + dk + 2, :]            # [1, 128]
    b2b = small[c + dk + 2:c + dk + 3, :]            # [1, 128]
    big = big_ref[...]                               # [hidden1+128, 128]
    w12 = big[0:hidden1, :]                          # [hidden1, 128]  (w1b @ w2a)
    w2b = big[hidden1:, :]                           # [128, 128]

    # Fused to_q / to_k projection over the folded batch: one matmul.
    qk = jnp.dot(x, wqk, preferred_element_type=f32)   # [b*hw, dq+dk]

    h_parts = []
    attn_parts = []
    for bi in range(b):                                # static unroll (b is tiny)
        sl = slice(bi * hw, (bi + 1) * hw)
        qb = qk[sl, 0:dq]                              # [hw, dq]
        kb = qk[sl, dq:dq + dk]                        # [hw, dk]

        # F.normalize(q^T / k^T, dim=-1, eps=1e-12): L2-normalize over the
        # token axis; clamping the sum of squares at 1e-24 == clamping the
        # norm at 1e-12.
        qn = qb * jax.lax.rsqrt(
            jnp.maximum(jnp.sum(qb * qb, axis=0, keepdims=True), 1e-24))
        kn = kb * jax.lax.rsqrt(
            jnp.maximum(jnp.sum(kb * kb, axis=0, keepdims=True), 1e-24))

        # attn = k_n^T @ q_n  -> [dk, dq]  (contract over the token axis)
        attn = jax.lax.dot_general(kn, qn, (((0,), (0,)), ((), ())),
                                   preferred_element_type=f32)

        # Per-row min-max normalization; exact divide (PyTorch has no epsilon).
        amin = jnp.min(attn, axis=-1, keepdims=True)
        amax = jnp.max(attn, axis=-1, keepdims=True)
        attn = (attn - amin) / (amax - amin)
        attn_parts.append(attn)

        # Algebraic fusion:
        #   y = x_b @ attn^T ; h = y @ w1a   ==   h = x_b @ (attn^T @ w1a)
        m1 = jax.lax.dot_general(attn, w1a, (((0,), (0,)), ((), ())),
                                 preferred_element_type=f32)     # [dq(=c), hidden1]
        h_parts.append(jnp.dot(x[sl, :], m1, preferred_element_type=f32))

    # Shared MLP tail on the stacked batch.
    h = jnp.concatenate(h_parts, axis=0) + b1a                   # [b*hw, hidden1]
    h = _gelu_exact(h)
    g = jnp.dot(h, w12, preferred_element_type=f32) + b12        # [b*hw, 128]
    g = _gelu_exact(g)
    o = jnp.dot(g, w2b, preferred_element_type=f32) + b2b        # [b*hw, 128]

    # Fold attn into the same lane-dense output slab (pad dq -> 128 lanes).
    attn_all = jnp.concatenate(attn_parts, axis=0)               # [b*dk, dq]
    pad = out_ref.shape[-1] - dq
    attn_slab = jnp.concatenate(
        [attn_all, jnp.zeros((b * dk, pad), f32)], axis=-1)      # [b*dk, 128]

    out_ref[...] = jnp.concatenate([o, attn_slab], axis=0)       # [b*hw + b*dk, 128]


def init_params(key, dim, dim_head, heads, n_filters):
    """Deterministic synthetic init (PyTorch-style uniform +/- 1/sqrt(fan_in))."""
    def linear(key, fan_in, fan_out, bias=True):
        kw, kb = jax.random.split(key)
        bound = 1.0 / math.sqrt(fan_in)
        w = jax.random.uniform(kw, (fan_in, fan_out), jnp.float32, -bound, bound)
        if not bias:
            return w, None
        b = jax.random.uniform(kb, (1, fan_out), jnp.float32, -bound, bound)
        return w, b

    keys = jax.random.split(key, 6)
    dq = dim_head * heads
    dk = n_filters * heads
    wq, _ = linear(keys[0], dim, dq, bias=False)
    wk, _ = linear(keys[1], dim, dk, bias=False)
    # mlp1: Mlp(n_filters, hidden=64, out=128)
    w1a, b1a = linear(keys[2], n_filters, 64)
    w1b, b1b = linear(keys[3], 64, 128)
    # mlp2: Mlp(128)  (hidden=128, out=128)
    w2a, b2a = linear(keys[4], 128, 128)
    w2b, b2b = linear(keys[5], 128, 128)
    return dict(wq=wq, wk=wk, w1a=w1a, b1a=b1a, w1b=w1b, b1b=b1b,
                w2a=w2a, b2a=b2a, w2b=w2b, b2b=b2b)


def prepare_params(params):
    """One-time weight precomposition + packing (outside the hot path)."""
    wq, wk = params["wq"], params["wk"]
    c, dq = wq.shape
    dk = wk.shape[1]
    hidden1 = params["w1a"].shape[1]          # 64
    d_out = params["w2b"].shape[1]            # 128

    wqk = jnp.concatenate([wq, wk], axis=1)                          # [c, dq+dk]
    # Exact precomposition of mlp1.fc2 with mlp2.fc1 (Dropout p=0 in between).
    w12 = params["w1b"] @ params["w2a"]                              # [64, 128]
    b12 = params["b1b"] @ params["w2a"] + params["b2a"]              # [1, 128]

    # Small-constant slab: wqk | w1a | b1a | b12 | b2b, padded to (8k, 128).
    n_rows = ((c + dk + 3 + 7) // 8) * 8
    small = jnp.zeros((n_rows, d_out), jnp.float32)
    small = small.at[0:c, 0:dq + dk].set(wqk)
    small = small.at[c:c + dk, 0:hidden1].set(params["w1a"])
    small = small.at[c + dk, 0:hidden1].set(params["b1a"][0])
    small = small.at[c + dk + 1, :].set(b12[0])
    small = small.at[c + dk + 2, :].set(params["b2b"][0])

    # Big-weight slab: fused w12 stacked on top of w2b.
    big = jnp.concatenate([w12, params["w2b"]], axis=0)              # [64+128, 128]

    return dict(small=small, big=big, dq=dq, dk=dk, hidden1=hidden1)


@functools.partial(jax.jit, static_argnums=(3, 4, 5))
def spectral_filter_forward(x_in, small, big, dq, dk, hidden1):
    """x_in: NCHW [b, c, H, W] float32. Returns (out [b,128,h,w], attn [b,dk,dq])."""
    b, c, H, W = x_in.shape
    h, w = H // 4, W // 4
    hw = h * w
    d_out = big.shape[1]

    # AvgPool2d(kernel=4, stride=4) + NCHW -> token layout [b*hw, c]; this glue
    # is fused into the same jit as the kernel call (one dispatch).
    xp = x_in.reshape(b, c, h, 4, w, 4).mean(axis=(3, 5))
    x_tok = jnp.transpose(xp, (0, 2, 3, 1)).reshape(b * hw, c)

    rows = b * hw + b * dk
    out_slab = pl.pallas_call(
        functools.partial(spectral_filter_kernel, b=b, hw=hw, c=c,
                          dq=dq, dk=dk, hidden1=hidden1),
        out_shape=jax.ShapeDtypeStruct((rows, d_out), jnp.float32),
    )(x_tok, small, big)

    out_feat = out_slab[:b * hw, :]                                  # [b*hw, 128]
    attn = out_slab[b * hw:, :dq].reshape(b, dk, dq)                 # [b, dk, dq]
    out = jnp.transpose(out_feat.reshape(b, h, w, d_out), (0, 3, 1, 2))
    return out, attn


def reference_forward(x_in, params):
    """Pure-JAX reference mirroring the PyTorch module (for a sanity check)."""
    b, c, H, W = x_in.shape
    h, w = H // 4, W // 4
    xp = x_in.reshape(b, c, h, 4, w, 4).mean(axis=(3, 5))
    x = jnp.transpose(xp, (0, 2, 3, 1)).reshape(b, h * w, c)
    q = jnp.swapaxes(x @ params["wq"], -1, -2)                       # [b, dq, hw]
    k = jnp.swapaxes(x @ params["wk"], -1, -2)                       # [b, dk, hw]
    qn = q / jnp.maximum(jnp.linalg.norm(q, axis=-1, keepdims=True), 1e-12)
    kn = k / jnp.maximum(jnp.linalg.norm(k, axis=-1, keepdims=True), 1e-12)
    attn = kn @ jnp.swapaxes(qn, -1, -2)                             # [b, dk, dq]
    amin = attn.min(-1, keepdims=True)
    amax = attn.max(-1, keepdims=True)
    attn = (attn - amin) / (amax - amin)
    y = jnp.transpose(attn @ jnp.swapaxes(x, -1, -2), (0, 2, 1))     # [b, hw, dk]
    h1 = _gelu_exact(y @ params["w1a"] + params["b1a"])
    h1 = h1 @ params["w1b"] + params["b1b"]
    h2 = _gelu_exact(h1 @ params["w2a"] + params["b2a"])
    h2 = h2 @ params["w2b"] + params["b2b"]
    out = jnp.transpose(h2.reshape(b, h, w, -1), (0, 3, 1, 2))
    return out, attn


if __name__ == "__main__":
    # Module config.  The PyTorch forward implicitly requires
    # dim_head*heads == dim (for attn @ x^T) and n_filters*heads == n_filters
    # (for mlp1's in_features), i.e. heads == 1 and dim_head == dim.
    dim = 16
    dim_head = 16
    heads = 1
    n_filters = 8

    key = jax.random.PRNGKey(0)
    k_x, k_p = jax.random.split(key)

    # NCHW input, like a PyTorch conv input
    x = jax.random.normal(k_x, (2, dim, 16, 16), dtype=jnp.float32)
    params = init_params(k_p, dim, dim_head, heads, n_filters)
    prepped = prepare_params(params)

    out, attn = spectral_filter_forward(x, prepped["small"], prepped["big"],
                                        prepped["dq"], prepped["dk"],
                                        prepped["hidden1"])
    out = jax.block_until_ready(out)
    attn = jax.block_until_ready(attn)

    assert out.shape == (2, 128, 4, 4), out.shape
    assert attn.shape == (2, n_filters * heads, dim_head * heads), attn.shape
    assert bool(jnp.all(jnp.isfinite(out))) and bool(jnp.all(jnp.isfinite(attn)))

    # Loose numerical check against a pure-JAX reference (TPU default matmul
    # precision differs slightly between XLA and Mosaic; tolerance covers it).
    ref_out, ref_attn = reference_forward(x, params)
    assert bool(jnp.allclose(out, ref_out, rtol=5e-2, atol=5e-2))
    assert bool(jnp.allclose(attn, ref_attn, rtol=5e-2, atol=5e-2))

    print("KERNEL_OK")
</pallas_src>

<mosaic_0001>
module attributes {stable_mosaic.version = 11 : i64} {
  func.func @spectral_filter_kernel(%arg0: memref<32x16xf32, #tpu.memory_space<vmem>>, %arg1: memref<32x128xf32, #tpu.memory_space<vmem>>, %arg2: memref<192x128xf32, #tpu.memory_space<vmem>>, %arg3: memref<48x128xf32, #tpu.memory_space<vmem>>) attributes {dimension_semantics = [], scalar_prefetch = 0 : i64, scratch_operands = 0 : i64, tpu.core_type = #tpu.core_type<tc>} {
    %c0 = arith.constant 0 : index
    %c0_0 = arith.constant 0 : index
    %0 = vector.load %arg0[%c0, %c0_0] : memref<32x16xf32, #tpu.memory_space<vmem>>, vector<32x16xf32>
    %c0_1 = arith.constant 0 : index
    %c0_2 = arith.constant 0 : index
    %1 = vector.load %arg1[%c0_1, %c0_2] : memref<32x128xf32, #tpu.memory_space<vmem>>, vector<32x128xf32>
    %2 = vector.extract_strided_slice %1 {offsets = [0, 0], sizes = [16, 24], strides = [1, 1]} : vector<32x128xf32> to vector<16x24xf32>
    %3 = vector.extract_strided_slice %1 {offsets = [16, 0], sizes = [8, 64], strides = [1, 1]} : vector<32x128xf32> to vector<8x64xf32>
    %4 = vector.extract_strided_slice %1 {offsets = [24, 0], sizes = [1, 64], strides = [1, 1]} : vector<32x128xf32> to vector<1x64xf32>
    %5 = vector.extract_strided_slice %1 {offsets = [25, 0], sizes = [1, 128], strides = [1, 1]} : vector<32x128xf32> to vector<1x128xf32>
    %6 = vector.extract_strided_slice %1 {offsets = [26, 0], sizes = [1, 128], strides = [1, 1]} : vector<32x128xf32> to vector<1x128xf32>
    %c0_3 = arith.constant 0 : index
    %c0_4 = arith.constant 0 : index
    %7 = vector.load %arg2[%c0_3, %c0_4] : memref<192x128xf32, #tpu.memory_space<vmem>>, vector<192x128xf32>
    %8 = vector.extract_strided_slice %7 {offsets = [0, 0], sizes = [64, 128], strides = [1, 1]} : vector<192x128xf32> to vector<64x128xf32>
    %9 = vector.extract_strided_slice %7 {offsets = [64, 0], sizes = [128, 128], strides = [1, 1]} : vector<192x128xf32> to vector<128x128xf32>
    %cst = arith.constant dense<0.000000e+00> : vector<32x24xf32>
    %10 = tpu.matmul %0, %2, %cst {dimension_numbers = #tpu.dot_dimension_numbers<[1], [0], [0], [1], [0, 0, 1, 1], [], []>} : vector<32x16xf32>, vector<16x24xf32>, vector<32x24xf32> -> vector<32x24xf32>
    %11 = vector.extract_strided_slice %10 {offsets = [0, 0], sizes = [16, 16], strides = [1, 1]} : vector<32x24xf32> to vector<16x16xf32>
    %12 = vector.extract_strided_slice %10 {offsets = [0, 16], sizes = [16, 8], strides = [1, 1]} : vector<32x24xf32> to vector<16x8xf32>
    %13 = arith.mulf %11, %11 : vector<16x16xf32>
    %cst_5 = arith.constant dense<0.000000e+00> : vector<16xf32>
    %14 = vector.multi_reduction <add>, %13, %cst_5 [0] : vector<16x16xf32> to vector<16xf32>
    %15 = vector.shape_cast %14 : vector<16xf32> to vector<1x16xf32>
    %cst_6 = arith.constant 1.000000e-24 : f32
    %16 = vector.broadcast %cst_6 : f32 to vector<1x16xf32>
    %17 = arith.maximumf %15, %16 : vector<1x16xf32>
    %18 = math.rsqrt %17 : vector<1x16xf32>
    %19 = vector.broadcast %18 : vector<1x16xf32> to vector<16x16xf32>
    %20 = arith.mulf %11, %19 : vector<16x16xf32>
    %21 = arith.mulf %12, %12 : vector<16x8xf32>
    %cst_7 = arith.constant dense<0.000000e+00> : vector<8xf32>
    %22 = vector.multi_reduction <add>, %21, %cst_7 [0] : vector<16x8xf32> to vector<8xf32>
    %23 = vector.shape_cast %22 : vector<8xf32> to vector<1x8xf32>
    %cst_8 = arith.constant 1.000000e-24 : f32
    %24 = vector.broadcast %cst_8 : f32 to vector<1x8xf32>
    %25 = arith.maximumf %23, %24 : vector<1x8xf32>
    %26 = math.rsqrt %25 : vector<1x8xf32>
    %27 = vector.broadcast %26 : vector<1x8xf32> to vector<16x8xf32>
    %28 = arith.mulf %12, %27 : vector<16x8xf32>
    %cst_9 = arith.constant dense<0.000000e+00> : vector<8x16xf32>
    %29 = tpu.matmul %28, %20, %cst_9 {dimension_numbers = #tpu.dot_dimension_numbers<[0], [0], [1], [1], [0, 1, 1, 1], [], []>} : vector<16x8xf32>, vector<16x16xf32>, vector<8x16xf32> -> vector<8x16xf32>
    %cst_10 = arith.constant dense<0x7F800000> : vector<8xf32>
    %30 = vector.multi_reduction <minimumf>, %29, %cst_10 [1] : vector<8x16xf32> to vector<8xf32>
    %31 = vector.shape_cast %30 : vector<8xf32> to vector<8x1xf32>
    %cst_11 = arith.constant dense<0xFF800000> : vector<8xf32>
    %32 = vector.multi_reduction <maximumf>, %29, %cst_11 [1] : vector<8x16xf32> to vector<8xf32>
    %33 = vector.shape_cast %32 : vector<8xf32> to vector<8x1xf32>
    %34 = vector.broadcast %31 : vector<8x1xf32> to vector<8x16xf32>
    %35 = arith.subf %29, %34 : vector<8x16xf32>
    %36 = arith.subf %33, %31 : vector<8x1xf32>
    %37 = vector.broadcast %36 : vector<8x1xf32> to vector<8x16xf32>
    %38 = arith.divf %35, %37 : vector<8x16xf32>
    %cst_12 = arith.constant dense<0.000000e+00> : vector<16x64xf32>
    %39 = tpu.matmul %38, %3, %cst_12 {dimension_numbers = #tpu.dot_dimension_numbers<[0], [0], [1], [1], [0, 1, 1, 1], [], []>} : vector<8x16xf32>, vector<8x64xf32>, vector<16x64xf32> -> vector<16x64xf32>
    %40 = vector.extract_strided_slice %0 {offsets = [0, 0], sizes = [16, 16], strides = [1, 1]} : vector<32x16xf32> to vector<16x16xf32>
    %cst_13 = arith.constant dense<0.000000e+00> : vector<16x64xf32>
    %41 = tpu.matmul %40, %39, %cst_13 {dimension_numbers = #tpu.dot_dimension_numbers<[1], [0], [0], [1], [0, 0, 1, 1], [], []>} : vector<16x16xf32>, vector<16x64xf32>, vector<16x64xf32> -> vector<16x64xf32>
    %42 = vector.extract_strided_slice %10 {offsets = [16, 0], sizes = [16, 16], strides = [1, 1]} : vector<32x24xf32> to vector<16x16xf32>
    %43 = vector.extract_strided_slice %10 {offsets = [16, 16], sizes = [16, 8], strides = [1, 1]} : vector<32x24xf32> to vector<16x8xf32>
    %44 = arith.mulf %42, %42 : vector<16x16xf32>
    %cst_14 = arith.constant dense<0.000000e+00> : vector<16xf32>
    %45 = vector.multi_reduction <add>, %44, %cst_14 [0] : vector<16x16xf32> to vector<16xf32>
    %46 = vector.shape_cast %45 : vector<16xf32> to vector<1x16xf32>
    %cst_15 = arith.constant 1.000000e-24 : f32
    %47 = vector.broadcast %cst_15 : f32 to vector<1x16xf32>
    %48 = arith.maximumf %46, %47 : vector<1x16xf32>
    %49 = math.rsqrt %48 : vector<1x16xf32>
    %50 = vector.broadcast %49 : vector<1x16xf32> to vector<16x16xf32>
    %51 = arith.mulf %42, %50 : vector<16x16xf32>
    %52 = arith.mulf %43, %43 : vector<16x8xf32>
    %cst_16 = arith.constant dense<0.000000e+00> : vector<8xf32>
    %53 = vector.multi_reduction <add>, %52, %cst_16 [0] : vector<16x8xf32> to vector<8xf32>
    %54 = vector.shape_cast %53 : vector<8xf32> to vector<1x8xf32>
    %cst_17 = arith.constant 1.000000e-24 : f32
    %55 = vector.broadcast %cst_17 : f32 to vector<1x8xf32>
    %56 = arith.maximumf %54, %55 : vector<1x8xf32>
    %57 = math.rsqrt %56 : vector<1x8xf32>
    %58 = vector.broadcast %57 : vector<1x8xf32> to vector<16x8xf32>
    %59 = arith.mulf %43, %58 : vector<16x8xf32>
    %cst_18 = arith.constant dense<0.000000e+00> : vector<8x16xf32>
    %60 = tpu.matmul %59, %51, %cst_18 {dimension_numbers = #tpu.dot_dimension_numbers<[0], [0], [1], [1], [0, 1, 1, 1], [], []>} : vector<16x8xf32>, vector<16x16xf32>, vector<8x16xf32> -> vector<8x16xf32>
    %cst_19 = arith.constant dense<0x7F800000> : vector<8xf32>
    %61 = vector.multi_reduction <minimumf>, %60, %cst_19 [1] : vector<8x16xf32> to vector<8xf32>
    %62 = vector.shape_cast %61 : vector<8xf32> to vector<8x1xf32>
    %cst_20 = arith.constant dense<0xFF800000> : vector<8xf32>
    %63 = vector.multi_reduction <maximumf>, %60, %cst_20 [1] : vector<8x16xf32> to vector<8xf32>
    %64 = vector.shape_cast %63 : vector<8xf32> to vector<8x1xf32>
    %65 = vector.broadcast %62 : vector<8x1xf32> to vector<8x16xf32>
    %66 = arith.subf %60, %65 : vector<8x16xf32>
    %67 = arith.subf %64, %62 : vector<8x1xf32>
    %68 = vector.broadcast %67 : vector<8x1xf32> to vector<8x16xf32>
    %69 = arith.divf %66, %68 : vector<8x16xf32>
    %cst_21 = arith.constant dense<0.000000e+00> : vector<16x64xf32>
    %70 = tpu.matmul %69, %3, %cst_21 {dimension_numbers = #tpu.dot_dimension_numbers<[0], [0], [1], [1], [0, 1, 1, 1], [], []>} : vector<8x16xf32>, vector<8x64xf32>, vector<16x64xf32> -> vector<16x64xf32>
    %71 = vector.extract_strided_slice %0 {offsets = [16, 0], sizes = [16, 16], strides = [1, 1]} : vector<32x16xf32> to vector<16x16xf32>
    %cst_22 = arith.constant dense<0.000000e+00> : vector<16x64xf32>
    %72 = tpu.matmul %71, %70, %cst_22 {dimension_numbers = #tpu.dot_dimension_numbers<[1], [0], [0], [1], [0, 0, 1, 1], [], []>} : vector<16x16xf32>, vector<16x64xf32>, vector<16x64xf32> -> vector<16x64xf32>
    %73 = tpu.concatenate %41, %72 in 0 : vector<16x64xf32>, vector<16x64xf32> -> vector<32x64xf32>
    %74 = vector.broadcast %4 : vector<1x64xf32> to vector<32x64xf32>
    %75 = arith.addf %73, %74 : vector<32x64xf32>
    %cst_23 = arith.constant 5.000000e-01 : f32
    %76 = vector.broadcast %cst_23 : f32 to vector<32x64xf32>
    %77 = arith.mulf %76, %75 : vector<32x64xf32>
    %cst_24 = arith.constant 2.000000e+00 : f32
    %78 = math.sqrt %cst_24 : f32
    %79 = vector.broadcast %78 : f32 to vector<32x64xf32>
    %80 = arith.divf %75, %79 : vector<32x64xf32>
    %81 = math.erf %80 : vector<32x64xf32>
    %cst_25 = arith.constant 1.000000e+00 : f32
    %82 = vector.broadcast %cst_25 : f32 to vector<32x64xf32>
    %83 = arith.addf %82, %81 : vector<32x64xf32>
    %84 = arith.mulf %77, %83 : vector<32x64xf32>
    %cst_26 = arith.constant dense<0.000000e+00> : vector<32x128xf32>
    %85 = tpu.matmul %84, %8, %cst_26 {dimension_numbers = #tpu.dot_dimension_numbers<[1], [0], [0], [1], [0, 0, 1, 1], [], []>} : vector<32x64xf32>, vector<64x128xf32>, vector<32x128xf32> -> vector<32x128xf32>
    %86 = vector.broadcast %5 : vector<1x128xf32> to vector<32x128xf32>
    %87 = arith.addf %85, %86 : vector<32x128xf32>
    %cst_27 = arith.constant 5.000000e-01 : f32
    %88 = vector.broadcast %cst_27 : f32 to vector<32x128xf32>
    %89 = arith.mulf %88, %87 : vector<32x128xf32>
    %cst_28 = arith.constant 2.000000e+00 : f32
    %90 = math.sqrt %cst_28 : f32
    %91 = vector.broadcast %90 : f32 to vector<32x128xf32>
    %92 = arith.divf %87, %91 : vector<32x128xf32>
    %93 = math.erf %92 : vector<32x128xf32>
    %cst_29 = arith.constant 1.000000e+00 : f32
    %94 = vector.broadcast %cst_29 : f32 to vector<32x128xf32>
    %95 = arith.addf %94, %93 : vector<32x128xf32>
    %96 = arith.mulf %89, %95 : vector<32x128xf32>
    %cst_30 = arith.constant dense<0.000000e+00> : vector<32x128xf32>
    %97 = tpu.matmul %96, %9, %cst_30 {dimension_numbers = #tpu.dot_dimension_numbers<[1], [0], [0], [1], [0, 0, 1, 1], [], []>} : vector<32x128xf32>, vector<128x128xf32>, vector<32x128xf32> -> vector<32x128xf32>
    %98 = vector.broadcast %6 : vector<1x128xf32> to vector<32x128xf32>
    %99 = arith.addf %97, %98 : vector<32x128xf32>
    %100 = tpu.concatenate %38, %69 in 0 : vector<8x16xf32>, vector<8x16xf32> -> vector<16x16xf32>
    %cst_31 = arith.constant 0.000000e+00 : f32
    %101 = vector.broadcast %cst_31 : f32 to vector<16x112xf32>
    %102 = tpu.concatenate %100, %101 in 1 : vector<16x16xf32>, vector<16x112xf32> -> vector<16x128xf32>
    %103 = tpu.concatenate %99, %102 in 0 : vector<32x128xf32>, vector<16x128xf32> -> vector<48x128xf32>
    %c0_32 = arith.constant 0 : index
    %c0_33 = arith.constant 0 : index
    %104 = vector.load %arg3[%c0_32, %c0_33] : memref<48x128xf32, #tpu.memory_space<vmem>>, vector<48x128xf32>
    tpu.vector_store %arg3[%c0_32, %c0_33], %103 {strides = array<i32>} : memref<48x128xf32, #tpu.memory_space<vmem>>, vector<48x128xf32>,
    return
  }
}

</mosaic_0001>

<llo_original>
// kernel: spectral_filter_forward.1
$region0: #{spectral_filter_forward.1}
  #allocation0 [shape = 'u32[]', space=smem, size = 0x4, offset = 0x4, fixed_abs, tag = 'smem constant byte address 0x4 - core index']
  #allocation1 [shape = 'u32[144,128]{1,0:T(1,128)}', space=vmem, size = 0x12000, scoped, tag = 'internal scratch']
  %s0 = inlined_call_operand.vmem [shape: f32[32,16], index: 0, kind: input, shape index: {}]
  %s1 = inlined_call_operand.vmem [shape: f32[32,128], index: 1, kind: input, shape index: {}]
  %s2 = inlined_call_operand.vmem [shape: f32[192,128], index: 2, kind: input, shape index: {}]
  %s3 = inlined_call_operand.vmem [shape: f32[48,128], index: 3, kind: output, shape index: {}]
  %s4 = sld [smem:[#allocation0]]
  $region22: #{spectral_filter_forward.1} parent=0
    _
  %s6 = ssub.s32 1, %s4
  %s7 = scalar_select 0, %s6, %s4
  // Predicated region
  $region2: #{spectral_filter_forward.1} parent=0 // pred_check
    _
  $region3: #{spectral_filter_forward.1} parent=0 // pred_check_branch
    %9 = sbr.rel (0) target = $region5
  $region4: #{spectral_filter_forward.1} parent=0 // pred_region
    _
  $region5: #{spectral_filter_forward.1} parent=0 // pred_fallthru
    _
  // Predicated region
  $region6: #{spectral_filter_forward.1} parent=0 // pred_check
    _
  $region7: #{spectral_filter_forward.1} parent=0 // pred_check_branch
    %11 = sbr.rel (0) target = $region9
  $region8: #{spectral_filter_forward.1} parent=0 // pred_region
    _
  $region9: #{spectral_filter_forward.1} parent=0 // pred_fallthru
    _
  // Predicated region
  $region10: #{spectral_filter_forward.1} parent=0 // pred_check
    _
  $region11: #{spectral_filter_forward.1} parent=0 // pred_check_branch
    %13 = sbr.rel (0) target = $region13
  $region12: #{spectral_filter_forward.1} parent=0 // pred_region
    _
  $region13: #{spectral_filter_forward.1} parent=0 // pred_fallthru
    _
  %v14 = vld [vmem:[%s0] sm:$0xff]
  %v15 = vld [vmem:[%s0 + $0x8] sm:$0xff]
  %v16 = vld [vmem:[%s0 + $0x10] sm:$0xff]
  %v17 = vld [vmem:[%s0 + $0x18] sm:$0xff]
  %v18 = vld [vmem:[%s1] sm:$0xff]
  %v19 = vld [vmem:[%s1 + $0x8] sm:$0xff]
  %v20 = vld [vmem:[%s1 + $0x10] sm:$0xff]
  %v21 = vld [vmem:[%s1 + $0x18] sm:$0xff]
  %v22 = vld [vmem:[%s2] sm:$0xff]
  %v23 = vld [vmem:[%s2 + $0x8] sm:$0xff]
  %v24 = vld [vmem:[%s2 + $0x10] sm:$0xff]
  %v25 = vld [vmem:[%s2 + $0x18] sm:$0xff]
  %v26 = vld [vmem:[%s2 + $0x20] sm:$0xff]
  %v27 = vld [vmem:[%s2 + $0x28] sm:$0xff]
  %v28 = vld [vmem:[%s2 + $0x30] sm:$0xff]
  %v29 = vld [vmem:[%s2 + $0x38] sm:$0xff]
  %v30 = vld [vmem:[%s2 + $0x40] sm:$0xff]
  %v31 = vld [vmem:[%s2 + $0x48] sm:$0xff]
  %v32 = vld [vmem:[%s2 + $0x50] sm:$0xff]
  %v33 = vld [vmem:[%s2 + $0x58] sm:$0xff]
  %v34 = vld [vmem:[%s2 + $0x60] sm:$0xff]
  %v35 = vld [vmem:[%s2 + $0x68] sm:$0xff]
  %v36 = vld [vmem:[%s2 + $0x70] sm:$0xff]
  %v37 = vld [vmem:[%s2 + $0x78] sm:$0xff]
  %v38 = vld [vmem:[%s2 + $0x80] sm:$0xff]
  %v39 = vld [vmem:[%s2 + $0x88] sm:$0xff]
  %v40 = vld [vmem:[%s2 + $0x90] sm:$0xff]
  %v41 = vld [vmem:[%s2 + $0x98] sm:$0xff]
  %v42 = vld [vmem:[%s2 + $0xa0] sm:$0xff]
  %v43 = vld [vmem:[%s2 + $0xa8] sm:$0xff]
  %v44 = vld [vmem:[%s2 + $0xb0] sm:$0xff]
  %v45 = vld [vmem:[%s2 + $0xb8] sm:$0xff]
  %vm46 = vcmask 130048
  %v48 = vsel %vm46, %v14, 0
  %v51 = vsel %vm46, %v15, 0
  %v54 = vsel %vm46, %v16, 0
  %v57 = vsel %vm46, %v17, 0
  %59 = vmatprep.subr.mxu0 0.0
  %60 = vmatpush1.msra.mxu0 0.0
  %61 = vmatprep.subr.mxu0 0.0
  %62 = vmatpush1.msra.mxu0 0.0
  %63 = vmatprep.subr.mxu0 0.0
  %64 = vmatpush1.msra.mxu0 0.0
  %65 = vmatprep.subr.mxu0 0.0
  %66 = vmatpush1.msra.mxu0 0.0
  %67 = vmatprep.subr.mxu0 0.0
  %68 = vmatpush1.msra.mxu0 0.0
  %69 = vmatprep.subr.mxu0 0.0
  %70 = vmatpush1.msra.mxu0 0.0
  %71 = vmatprep.subr.mxu0 0.0
  %72 = vmatpush1.msra.mxu0 0.0
  %73 = vmatprep.subr.mxu0 0.0
  %74 = vmatpush1.msra.mxu0 0.0
  %75 = vmatprep.subr.mxu0 0.0
  %76 = vmatpush1.msra.mxu0 0.0
  %77 = vmatprep.subr.mxu0 0.0
  %78 = vmatpush1.msra.mxu0 0.0
  %79 = vmatprep.subr.mxu0 0.0
  %80 = vmatpush1.msra.mxu0 0.0
  %81 = vmatprep.subr.mxu0 0.0
  %82 = vmatpush1.msra.mxu0 0.0
  %83 = vmatprep.subr.mxu0 0.0
  %84 = vmatpush1.msra.mxu0 0.0
  %85 = vmatprep.subr.mxu0 0.0
  %86 = vmatpush1.msra.mxu0 0.0
  %87 = vmatprep.subr.mxu0 0.0
  %88 = vmatpush1.msra.mxu0 %v19
  %89 = vmatprep.subr.mxu0 0.0
  %90 = vmatpush1.msra.mxu0 %v18
  %91 = vmatprep.subr.mxu0 0.0
  %92 = vmatpush2.msra.mxu0 0.0
  %93 = vmatprep.subr.mxu0 0.0
  %94 = vmatpush2.msra.mxu0 0.0
  %95 = vmatprep.subr.mxu0 0.0
  %96 = vmatpush2.msra.mxu0 0.0
  %97 = vmatprep.subr.mxu0 0.0
  %98 = vmatpush2.msra.mxu0 0.0
  %99 = vmatprep.subr.mxu0 0.0
  %100 = vmatpush2.msra.mxu0 0.0
  %101 = vmatprep.subr.mxu0 0.0
  %102 = vmatpush2.msra.mxu0 0.0
  %103 = vmatprep.subr.mxu0 0.0
  %104 = vmatpush2.msra.mxu0 0.0
  %105 = vmatprep.subr.mxu0 0.0
  %106 = vmatpush2.msra.mxu0 0.0
  %107 = vmatprep.subr.mxu0 0.0
  %108 = vmatpush2.msra.mxu0 0.0
  %109 = vmatprep.subr.mxu0 0.0
  %110 = vmatpush2.msra.mxu0 0.0
  %111 = vmatprep.subr.mxu0 0.0
  %112 = vmatpush2.msra.mxu0 0.0
  %113 = vmatprep.subr.mxu0 0.0
  %114 = vmatpush2.msra.mxu0 0.0
  %115 = vmatprep.subr.mxu0 0.0
  %116 = vmatpush2.msra.mxu0 0.0
  %117 = vmatprep.subr.mxu0 0.0
  %118 = vmatpush2.msra.mxu0 0.0
  %119 = vmatprep.subr.mxu0 0.0
  %120 = vmatpush2.msra.mxu0 0.0
  %121 = vmatprep.subr.mxu0 0.0
  %122 = vmatpush2.msra.mxu0 0.0
  %123 = vmatprep.mubr.f32.mxu0 0.0
  %124 = vmatmul.mubr.f32.gmra.mxu0 %v48
  %v125 = vpop.f32.mrf.mxu0
  %v126 = vadd.f32 0.0, %v125
  %v127 = vpop.f32.mrf.mxu0
  %128 = vmatprep.mubr.f32.mxu0 0.0
  %129 = vmatmul.mubr.f32.gmra.mxu0 %v51
  %v130 = vpop.f32.mrf.mxu0
  %v131 = vadd.f32 0.0, %v130
  %v132 = vpop.f32.mrf.mxu0
  %133 = vmatprep.mubr.f32.mxu0 0.0
  %134 = vmatmul.mubr.f32.gmra.mxu0 %v54
  %v135 = vpop.f32.mrf.mxu0
  %v136 = vadd.f32 0.0, %v135
  %v137 = vpop.f32.mrf.mxu0
  %138 = vmatprep.mubr.f32.mxu0 0.0
  %139 = vmatmul.mubr.f32.gmra.mxu0 %v57
  %v140 = vpop.f32.mrf.mxu0
  %v141 = vadd.f32 0.0, %v140
  %v142 = vpop.f32.mrf.mxu0
  %143 = vdwg.mxu0
  %v144 = vmul.f32 %v126, %v126
  %v145 = vmul.f32 %v131, %v131
  %v146 = vsel %vm46, %v144, 0.0
  %v147 = vsel %vm46, %v145, 0.0
  %v148 = vadd.f32 %v146, %v147
  %v149 = vrot.slane %v148, 4
  %v150 = vadd.f32 %v148, %v149
  %v151 = vrot.slane %v150, 2
  %v152 = vadd.f32 %v150, %v151
  %v153 = vrot.slane %v152, 1
  %v154 = vadd.f32 %v152, %v153
  %v155 = vmax.f32 %v154, 1e-24
  %v156 = vrsqrt.pop %v155
  %v157 = vmul.f32 %v126, %v156
  %v158 = vmul.f32 %v131, %v156
  %vm159 = vcmask 195712
  %v160 = vsel %vm159, %v144, 0.0
  %v161 = vsel %vm159, %v145, 0.0
  %v162 = vadd.f32 %v160, %v161
  %v163 = vrot.slane %v162, 4
  %v164 = vadd.f32 %v162, %v163
  %v165 = vrot.slane %v164, 2
  %v166 = vadd.f32 %v164, %v165
  %v167 = vrot.slane %v166, 1
  %v168 = vadd.f32 %v166, %v167
  %v169 = vmax.f32 %v168, 1e-24
  %v170 = vrsqrt.pop %v169
  %v171 = vmul.f32 %v126, %v170
  %v172 = vmul.f32 %v131, %v170
  %175 = vrot.lane.b32.xlu0 %v171, 112
  %v176 = vpop.permute.xlu0 %175
  %177 = vrot.lane.b32.xlu0 %v172, 112
  %v178 = vpop.permute.xlu0 %177
  %181 = vxpose.xlu0.b32.start [1/16] %v176, 128
  %182 = vxpose.xlu0.b32.cont [2/16] %v178, 128
  %183 = vxpose.xlu0.b32.cont [3/16] 0.0, 128
  %184 = vxpose.xlu0.b32.cont [4/16] 0.0, 128
  %185 = vxpose.xlu0.b32.cont [5/16] 0.0, 128
  %186 = vxpose.xlu0.b32.cont [6/16] 0.0, 128
  %187 = vxpose.xlu0.b32.cont [7/16] 0.0, 128
  %188 = vxpose.xlu0.b32.cont [8/16] 0.0, 128
  %189 = vxpose.xlu0.b32.cont [9/16] 0.0, 128
  %190 = vxpose.xlu0.b32.cont [10/16] 0.0, 128
  %191 = vxpose.xlu0.b32.cont [11/16] 0.0, 128
  %192 = vxpose.xlu0.b32.cont [12/16] 0.0, 128
  %193 = vxpose.xlu0.b32.cont [13/16] 0.0, 128
  %194 = vxpose.xlu0.b32.cont [14/16] 0.0, 128
  %195 = vxpose.xlu0.b32.cont [15/16] 0.0, 128
  %196 = vxpose.xlu0.b32.end [16/16] 0.0, 128
  %v197 = vpop.trf.xlu0
  %v198 = vpop.trf.xlu0
  %v199 = vpop.trf.xlu0
  %v200 = vpop.trf.xlu0
  %v201 = vpop.trf.xlu0
  %v202 = vpop.trf.xlu0
  %v203 = vpop.trf.xlu0
  %v204 = vpop.trf.xlu0
  %v205 = vpop.trf.xlu0
  %v206 = vpop.trf.xlu0
  %v207 = vpop.trf.xlu0
  %v208 = vpop.trf.xlu0
  %v209 = vpop.trf.xlu0
  %v210 = vpop.trf.xlu0
  %v211 = vpop.trf.xlu0
  %v212 = vpop.trf.xlu0
  %v214 = vsel %vm46, %v197, 0
  %216 = vmatprep.subr.mxu0 0.0
  %217 = vmatpush1.msra.mxu0 0.0
  %218 = vmatprep.subr.mxu0 0.0
  %219 = vmatpush1.msra.mxu0 0.0
  %220 = vmatprep.subr.mxu0 0.0
  %221 = vmatpush1.msra.mxu0 0.0
  %222 = vmatprep.subr.mxu0 0.0
  %223 = vmatpush1.msra.mxu0 0.0
  %224 = vmatprep.subr.mxu0 0.0
  %225 = vmatpush1.msra.mxu0 0.0
  %226 = vmatprep.subr.mxu0 0.0
  %227 = vmatpush1.msra.mxu0 0.0
  %228 = vmatprep.subr.mxu0 0.0
  %229 = vmatpush1.msra.mxu0 0.0
  %230 = vmatprep.subr.mxu0 0.0
  %231 = vmatpush1.msra.mxu0 0.0
  %232 = vmatprep.subr.mxu0 0.0
  %233 = vmatpush1.msra.mxu0 0.0
  %234 = vmatprep.subr.mxu0 0.0
  %235 = vmatpush1.msra.mxu0 0.0
  %236 = vmatprep.subr.mxu0 0.0
  %237 = vmatpush1.msra.mxu0 0.0
  %238 = vmatprep.subr.mxu0 0.0
  %239 = vmatpush1.msra.mxu0 0.0
  %240 = vmatprep.subr.mxu0 0.0
  %241 = vmatpush1.msra.mxu0 0.0
  %242 = vmatprep.subr.mxu0 0.0
  %243 = vmatpush1.msra.mxu0 0.0
  %244 = vmatprep.subr.mxu0 0.0
  %245 = vmatpush1.msra.mxu0 %v158
  %246 = vmatprep.subr.mxu0 0.0
  %247 = vmatpush1.msra.mxu0 %v157
  %248 = vmatprep.subr.mxu0 0.0
  %249 = vmatpush2.msra.mxu0 0.0
  %250 = vmatprep.subr.mxu0 0.0
  %251 = vmatpush2.msra.mxu0 0.0
  %252 = vmatprep.subr.mxu0 0.0
  %253 = vmatpush2.msra.mxu0 0.0
  %254 = vmatprep.subr.mxu0 0.0
  %255 = vmatpush2.msra.mxu0 0.0
  %256 = vmatprep.subr.mxu0 0.0
  %257 = vmatpush2.msra.mxu0 0.0
  %258 = vmatprep.subr.mxu0 0.0
  %259 = vmatpush2.msra.mxu0 0.0
  %260 = vmatprep.subr.mxu0 0.0
  %261 = vmatpush2.msra.mxu0 0.0
  %262 = vmatprep.subr.mxu0 0.0
  %263 = vmatpush2.msra.mxu0 0.0
  %264 = vmatprep.subr.mxu0 0.0
  %265 = vmatpush2.msra.mxu0 0.0
  %266 = vmatprep.subr.mxu0 0.0
  %267 = vmatpush2.msra.mxu0 0.0
  %268 = vmatprep.subr.mxu0 0.0
  %269 = vmatpush2.msra.mxu0 0.0
  %270 = vmatprep.subr.mxu0 0.0
  %271 = vmatpush2.msra.mxu0 0.0
  %272 = vmatprep.subr.mxu0 0.0
  %273 = vmatpush2.msra.mxu0 0.0
  %274 = vmatprep.subr.mxu0 0.0
  %275 = vmatpush2.msra.mxu0 0.0
  %276 = vmatprep.subr.mxu0 0.0
  %277 = vmatpush2.msra.mxu0 0.0
  %278 = vmatprep.subr.mxu0 0.0
  %279 = vmatpush2.msra.mxu0 0.0
  %280 = vmatprep.mubr.f32.mxu0 0.0
  %281 = vmatmul.mubr.f32.gmra.mxu0 %v214
  %v282 = vpop.f32.mrf.mxu0
  %v283 = vadd.f32 0.0, %v282
  %v284 = vpop.f32.mrf.mxu0
  %285 = vdwg.mxu0
  %v286 = vsel %vm46, %v283, inf
  %287 = vmin.xlane.f32.xlu0 %v286
  %v288 = vpop.xlane.xlu0 %287
  %v289 = vsel %vm46, %v283, -inf
  %290 = vmax.xlane.f32.xlu0 %v289
  %v291 = vpop.xlane.xlu0 %290
  %v292 = vsub.f32 %v283, %v288
  %v293 = vsub.f32 %v291, %v288
  %v294 = vrcp.pop %v293
  %v295 = vmul.f32 %v292, %v294
  %296 = vxpose.xlu0.b32.start [1/16] %v295, 128
  %297 = vxpose.xlu0.b32.cont [2/16] 0.0, 128
  %298 = vxpose.xlu0.b32.cont [3/16] 0.0, 128
  %299 = vxpose.xlu0.b32.cont [4/16] 0.0, 128
  %300 = vxpose.xlu0.b32.cont [5/16] 0.0, 128
  %301 = vxpose.xlu0.b32.cont [6/16] 0.0, 128
  %302 = vxpose.xlu0.b32.cont [7/16] 0.0, 128
  %303 = vxpose.xlu0.b32.cont [8/16] 0.0, 128
  %304 = vxpose.xlu0.b32.cont [9/16] 0.0, 128
  %305 = vxpose.xlu0.b32.cont [10/16] 0.0, 128
  %306 = vxpose.xlu0.b32.cont [11/16] 0.0, 128
  %307 = vxpose.xlu0.b32.cont [12/16] 0.0, 128
  %308 = vxpose.xlu0.b32.cont [13/16] 0.0, 128
  %309 = vxpose.xlu0.b32.cont [14/16] 0.0, 128
  %310 = vxpose.xlu0.b32.cont [15/16] 0.0, 128
  %311 = vxpose.xlu0.b32.end [16/16] 0.0, 128
  %v312 = vpop.trf.xlu0
  %v313 = vpop.trf.xlu0
  %v314 = vpop.trf.xlu0
  %v315 = vpop.trf.xlu0
  %v316 = vpop.trf.xlu0
  %v317 = vpop.trf.xlu0
  %v318 = vpop.trf.xlu0
  %v319 = vpop.trf.xlu0
  %v320 = vpop.trf.xlu0
  %v321 = vpop.trf.xlu0
  %v322 = vpop.trf.xlu0
  %v323 = vpop.trf.xlu0
  %v324 = vpop.trf.xlu0
  %v325 = vpop.trf.xlu0
  %v326 = vpop.trf.xlu0
  %v327 = vpop.trf.xlu0
  %vm328 = vcmask 64512
  %v330 = vsel %vm328, %v312, 0
  %v333 = vsel %vm328, %v313, 0
  %335 = vmatprep.subr.mxu0 0.0
  %336 = vmatpush1.msra.mxu0 0.0
  %337 = vmatprep.subr.mxu0 0.0
  %338 = vmatpush1.msra.mxu0 0.0
  %339 = vmatprep.subr.mxu0 0.0
  %340 = vmatpush1.msra.mxu0 0.0
  %341 = vmatprep.subr.mxu0 0.0
  %342 = vmatpush1.msra.mxu0 0.0
  %343 = vmatprep.subr.mxu0 0.0
  %344 = vmatpush1.msra.mxu0 0.0
  %345 = vmatprep.subr.mxu0 0.0
  %346 = vmatpush1.msra.mxu0 0.0
  %347 = vmatprep.subr.mxu0 0.0
  %348 = vmatpush1.msra.mxu0 0.0
  %349 = vmatprep.subr.mxu0 0.0
  %350 = vmatpush1.msra.mxu0 0.0
  %351 = vmatprep.subr.mxu0 0.0
  %352 = vmatpush1.msra.mxu0 0.0
  %353 = vmatprep.subr.mxu0 0.0
  %354 = vmatpush1.msra.mxu0 0.0
  %355 = vmatprep.subr.mxu0 0.0
  %356 = vmatpush1.msra.mxu0 0.0
  %357 = vmatprep.subr.mxu0 0.0
  %358 = vmatpush1.msra.mxu0 0.0
  %359 = vmatprep.subr.mxu0 0.0
  %360 = vmatpush1.msra.mxu0 0.0
  %361 = vmatprep.subr.mxu0 0.0
  %362 = vmatpush1.msra.mxu0 0.0
  %363 = vmatprep.subr.mxu0 0.0
  %364 = vmatpush1.msra.mxu0 0.0
  %365 = vmatprep.subr.mxu0 0.0
  %366 = vmatpush1.msra.mxu0 %v20
  %367 = vmatprep.subr.mxu0 0.0
  %368 = vmatpush2.msra.mxu0 0.0
  %369 = vmatprep.subr.mxu0 0.0
  %370 = vmatpush2.msra.mxu0 0.0
  %371 = vmatprep.subr.mxu0 0.0
  %372 = vmatpush2.msra.mxu0 0.0
  %373 = vmatprep.subr.mxu0 0.0
  %374 = vmatpush2.msra.mxu0 0.0
  %375 = vmatprep.subr.mxu0 0.0
  %376 = vmatpush2.msra.mxu0 0.0
  %377 = vmatprep.subr.mxu0 0.0
  %378 = vmatpush2.msra.mxu0 0.0
  %379 = vmatprep.subr.mxu0 0.0
  %380 = vmatpush2.msra.mxu0 0.0
  %381 = vmatprep.subr.mxu0 0.0
  %382 = vmatpush2.msra.mxu0 0.0
  %383 = vmatprep.subr.mxu0 0.0
  %384 = vmatpush2.msra.mxu0 0.0
  %385 = vmatprep.subr.mxu0 0.0
  %386 = vmatpush2.msra.mxu0 0.0
  %387 = vmatprep.subr.mxu0 0.0
  %388 = vmatpush2.msra.mxu0 0.0
  %389 = vmatprep.subr.mxu0 0.0
  %390 = vmatpush2.msra.mxu0 0.0
  %391 = vmatprep.subr.mxu0 0.0
  %392 = vmatpush2.msra.mxu0 0.0
  %393 = vmatprep.subr.mxu0 0.0
  %394 = vmatpush2.msra.mxu0 0.0
  %395 = vmatprep.subr.mxu0 0.0
  %396 = vmatpush2.msra.mxu0 0.0
  %397 = vmatprep.subr.mxu0 0.0
  %398 = vmatpush2.msra.mxu0 0.0
  %399 = vmatprep.mubr.f32.mxu0 0.0
  %400 = vmatmul.mubr.f32.gmra.mxu0 %v330
  %v401 = vpop.f32.mrf.mxu0
  %v402 = vadd.f32 0.0, %v401
  %v403 = vpop.f32.mrf.mxu0
  %404 = vmatprep.mubr.f32.mxu0 0.0
  %405 = vmatmul.mubr.f32.gmra.mxu0 %v333
  %v406 = vpop.f32.mrf.mxu0
  %v407 = vadd.f32 0.0, %v406
  %v408 = vpop.f32.mrf.mxu0
  %409 = vdwg.mxu0
  %410 = vmatprep.subr.mxu0 0.0
  %411 = vmatpush1.msra.mxu0 0.0
  %412 = vmatprep.subr.mxu0 0.0
  %413 = vmatpush1.msra.mxu0 0.0
  %414 = vmatprep.subr.mxu0 0.0
  %415 = vmatpush1.msra.mxu0 0.0
  %416 = vmatprep.subr.mxu0 0.0
  %417 = vmatpush1.msra.mxu0 0.0
  %418 = vmatprep.subr.mxu0 0.0
  %419 = vmatpush1.msra.mxu0 0.0
  %420 = vmatprep.subr.mxu0 0.0
  %421 = vmatpush1.msra.mxu0 0.0
  %422 = vmatprep.subr.mxu0 0.0
  %423 = vmatpush1.msra.mxu0 0.0
  %424 = vmatprep.subr.mxu0 0.0
  %425 = vmatpush1.msra.mxu0 0.0
  %426 = vmatprep.subr.mxu0 0.0
  %427 = vmatpush1.msra.mxu0 0.0
  %428 = vmatprep.subr.mxu0 0.0
  %429 = vmatpush1.msra.mxu0 0.0
  %430 = vmatprep.subr.mxu0 0.0
  %431 = vmatpush1.msra.mxu0 0.0
  %432 = vmatprep.subr.mxu0 0.0
  %433 = vmatpush1.msra.mxu0 0.0
  %434 = vmatprep.subr.mxu0 0.0
  %435 = vmatpush1.msra.mxu0 0.0
  %436 = vmatprep.subr.mxu0 0.0
  %437 = vmatpush1.msra.mxu0 0.0
  %438 = vmatprep.subr.mxu0 0.0
  %439 = vmatpush1.msra.mxu0 %v407
  %440 = vmatprep.subr.mxu0 0.0
  %441 = vmatpush1.msra.mxu0 %v402
  %442 = vmatprep.subr.mxu0 0.0
  %443 = vmatpush2.msra.mxu0 0.0
  %444 = vmatprep.subr.mxu0 0.0
  %445 = vmatpush2.msra.mxu0 0.0
  %446 = vmatprep.subr.mxu0 0.0
  %447 = vmatpush2.msra.mxu0 0.0
  %448 = vmatprep.subr.mxu0 0.0
  %449 = vmatpush2.msra.mxu0 0.0
  %450 = vmatprep.subr.mxu0 0.0
  %451 = vmatpush2.msra.mxu0 0.0
  %452 = vmatprep.subr.mxu0 0.0
  %453 = vmatpush2.msra.mxu0 0.0
  %454 = vmatprep.subr.mxu0 0.0
  %455 = vmatpush2.msra.mxu0 0.0
  %456 = vmatprep.subr.mxu0 0.0
  %457 = vmatpush2.msra.mxu0 0.0
  %458 = vmatprep.subr.mxu0 0.0
  %459 = vmatpush2.msra.mxu0 0.0
  %460 = vmatprep.subr.mxu0 0.0
  %461 = vmatpush2.msra.mxu0 0.0
  %462 = vmatprep.subr.mxu0 0.0
  %463 = vmatpush2.msra.mxu0 0.0
  %464 = vmatprep.subr.mxu0 0.0
  %465 = vmatpush2.msra.mxu0 0.0
  %466 = vmatprep.subr.mxu0 0.0
  %467 = vmatpush2.msra.mxu0 0.0
  %468 = vmatprep.subr.mxu0 0.0
  %469 = vmatpush2.msra.mxu0 0.0
  %470 = vmatprep.subr.mxu0 0.0
  %471 = vmatpush2.msra.mxu0 0.0
  %472 = vmatprep.subr.mxu0 0.0
  %473 = vmatpush2.msra.mxu0 0.0
  %474 = vmatprep.mubr.f32.mxu0 0.0
  %475 = vmatmul.mubr.f32.gmra.mxu0 %v48
  %v476 = vpop.f32.mrf.mxu0
  %v477 = vadd.f32 0.0, %v476
  %v478 = vpop.f32.mrf.mxu0
  %479 = vmatprep.mubr.f32.mxu0 0.0
  %480 = vmatmul.mubr.f32.gmra.mxu0 %v51
  %v481 = vpop.f32.mrf.mxu0
  %v482 = vadd.f32 0.0, %v481
  %v483 = vpop.f32.mrf.mxu0
  %484 = vdwg.mxu0
  %v485 = vmul.f32 %v136, %v136
  %v486 = vmul.f32 %v141, %v141
  %v487 = vsel %vm46, %v485, 0.0
  %v488 = vsel %vm46, %v486, 0.0
  %v489 = vadd.f32 %v487, %v488
  %v490 = vrot.slane %v489, 4
  %v491 = vadd.f32 %v489, %v490
  %v492 = vrot.slane %v491, 2
  %v493 = vadd.f32 %v491, %v492
  %v494 = vrot.slane %v493, 1
  %v495 = vadd.f32 %v493, %v494
  %v496 = vmax.f32 %v495, 1e-24
  %v497 = vrsqrt.pop %v496
  %v498 = vmul.f32 %v136, %v497
  %v499 = vmul.f32 %v141, %v497
  %v500 = vsel %vm159, %v485, 0.0
  %v501 = vsel %vm159, %v486, 0.0
  %v502 = vadd.f32 %v500, %v501
  %v503 = vrot.slane %v502, 4
  %v504 = vadd.f32 %v502, %v503
  %v505 = vrot.slane %v504, 2
  %v506 = vadd.f32 %v504, %v505
  %v507 = vrot.slane %v506, 1
  %v508 = vadd.f32 %v506, %v507
  %v509 = vmax.f32 %v508, 1e-24
  %v510 = vrsqrt.pop %v509
  %v511 = vmul.f32 %v136, %v510
  %v512 = vmul.f32 %v141, %v510
  %515 = vrot.lane.b32.xlu0 %v511, 112
  %v516 = vpop.permute.xlu0 %515
  %517 = vrot.lane.b32.xlu0 %v512, 112
  %v518 = vpop.permute.xlu0 %517
  %521 = vxpose.xlu0.b32.start [1/16] %v516, 128
  %522 = vxpose.xlu0.b32.cont [2/16] %v518, 128
  %523 = vxpose.xlu0.b32.cont [3/16] 0.0, 128
  %524 = vxpose.xlu0.b32.cont [4/16] 0.0, 128
  %525 = vxpose.xlu0.b32.cont [5/16] 0.0, 128
  %526 = vxpose.xlu0.b32.cont [6/16] 0.0, 128
  %527 = vxpose.xlu0.b32.cont [7/16] 0.0, 128
  %528 = vxpose.xlu0.b32.cont [8/16] 0.0, 128
  %529 = vxpose.xlu0.b32.cont [9/16] 0.0, 128
  %530 = vxpose.xlu0.b32.cont [10/16] 0.0, 128
  %531 = vxpose.xlu0.b32.cont [11/16] 0.0, 128
  %532 = vxpose.xlu0.b32.cont [12/16] 0.0, 128
  %533 = vxpose.xlu0.b32.cont [13/16] 0.0, 128
  %534 = vxpose.xlu0.b32.cont [14/16] 0.0, 128
  %535 = vxpose.xlu0.b32.cont [15/16] 0.0, 128
  %536 = vxpose.xlu0.b32.end [16/16] 0.0, 128
  %v537 = vpop.trf.xlu0
  %v538 = vpop.trf.xlu0
  %v539 = vpop.trf.xlu0
  %v540 = vpop.trf.xlu0
  %v541 = vpop.trf.xlu0
  %v542 = vpop.trf.xlu0
  %v543 = vpop.trf.xlu0
  %v544 = vpop.trf.xlu0
  %v545 = vpop.trf.xlu0
  %v546 = vpop.trf.xlu0
  %v547 = vpop.trf.xlu0
  %v548 = vpop.trf.xlu0
  %v549 = vpop.trf.xlu0
  %v550 = vpop.trf.xlu0
  %v551 = vpop.trf.xlu0
  %v552 = vpop.trf.xlu0
  %v554 = vsel %vm46, %v537, 0
  %556 = vmatprep.subr.mxu0 0.0
  %557 = vmatpush1.msra.mxu0 0.0
  %558 = vmatprep.subr.mxu0 0.0
  %559 = vmatpush1.msra.mxu0 0.0
  %560 = vmatprep.subr.mxu0 0.0
  %561 = vmatpush1.msra.mxu0 0.0
  %562 = vmatprep.subr.mxu0 0.0
  %563 = vmatpush1.msra.mxu0 0.0
  %564 = vmatprep.subr.mxu0 0.0
  %565 = vmatpush1.msra.mxu0 0.0
  %566 = vmatprep.subr.mxu0 0.0
  %567 = vmatpush1.msra.mxu0 0.0
  %568 = vmatprep.subr.mxu0 0.0
  %569 = vmatpush1.msra.mxu0 0.0
  %570 = vmatprep.subr.mxu0 0.0
  %571 = vmatpush1.msra.mxu0 0.0
  %572 = vmatprep.subr.mxu0 0.0
  %573 = vmatpush1.msra.mxu0 0.0
  %574 = vmatprep.subr.mxu0 0.0
  %575 = vmatpush1.msra.mxu0 0.0
  %576 = vmatprep.subr.mxu0 0.0
  %577 = vmatpush1.msra.mxu0 0.0
  %578 = vmatprep.subr.mxu0 0.0
  %579 = vmatpush1.msra.mxu0 0.0
  %580 = vmatprep.subr.mxu0 0.0
  %581 = vmatpush1.msra.mxu0 0.0
  %582 = vmatprep.subr.mxu0 0.0
  %583 = vmatpush1.msra.mxu0 0.0
  %584 = vmatprep.subr.mxu0 0.0
  %585 = vmatpush1.msra.mxu0 %v499
  %586 = vmatprep.subr.mxu0 0.0
  %587 = vmatpush1.msra.mxu0 %v498
  %588 = vmatprep.subr.mxu0 0.0
  %589 = vmatpush2.msra.mxu0 0.0
  %590 = vmatprep.subr.mxu0 0.0
  %591 = vmatpush2.msra.mxu0 0.0
  %592 = vmatprep.subr.mxu0 0.0
  %593 = vmatpush2.msra.mxu0 0.0
  %594 = vmatprep.subr.mxu0 0.0
  %595 = vmatpush2.msra.mxu0 0.0
  %596 = vmatprep.subr.mxu0 0.0
  %597 = vmatpush2.msra.mxu0 0.0
  %598 = vmatprep.subr.mxu0 0.0
  %599 = vmatpush2.msra.mxu0 0.0
  %600 = vmatprep.subr.mxu0 0.0
  %601 = vmatpush2.msra.mxu0 0.0
  %602 = vmatprep.subr.mxu0 0.0
  %603 = vmatpush2.msra.mxu0 0.0
  %604 = vmatprep.subr.mxu0 0.0
  %605 = vmatpush2.msra.mxu0 0.0
  %606 = vmatprep.subr.mxu0 0.0
  %607 = vmatpush2.msra.mxu0 0.0
  %608 = vmatprep.subr.mxu0 0.0
  %609 = vmatpush2.msra.mxu0 0.0
  %610 = vmatprep.subr.mxu0 0.0
  %611 = vmatpush2.msra.mxu0 0.0
  %612 = vmatprep.subr.mxu0 0.0
  %613 = vmatpush2.msra.mxu0 0.0
  %614 = vmatprep.subr.mxu0 0.0
  %615 = vmatpush2.msra.mxu0 0.0
  %616 = vmatprep.subr.mxu0 0.0
  %617 = vmatpush2.msra.mxu0 0.0
  %618 = vmatprep.subr.mxu0 0.0
  %619 = vmatpush2.msra.mxu0 0.0
  %620 = vmatprep.mubr.f32.mxu0 0.0
  %621 = vmatmul.mubr.f32.gmra.mxu0 %v554
  %v622 = vpop.f32.mrf.mxu0
  %v623 = vadd.f32 0.0, %v622
  %v624 = vpop.f32.mrf.mxu0
  %625 = vdwg.mxu0
  %v626 = vsel %vm46, %v623, inf
  %627 = vmin.xlane.f32.xlu0 %v626
  %v628 = vpop.xlane.xlu0 %627
  %v629 = vsel %vm46, %v623, -inf
  %630 = vmax.xlane.f32.xlu0 %v629
  %v631 = vpop.xlane.xlu0 %630
  %v632 = vsub.f32 %v623, %v628
  %v633 = vsub.f32 %v631, %v628
  %v634 = vrcp.pop %v633
  %v635 = vmul.f32 %v632, %v634
  %636 = vxpose.xlu0.b32.start [1/16] %v635, 128
  %637 = vxpose.xlu0.b32.cont [2/16] 0.0, 128
  %638 = vxpose.xlu0.b32.cont [3/16] 0.0, 128
  %639 = vxpose.xlu0.b32.cont [4/16] 0.0, 128
  %640 = vxpose.xlu0.b32.cont [5/16] 0.0, 128
  %641 = vxpose.xlu0.b32.cont [6/16] 0.0, 128
  %642 = vxpose.xlu0.b32.cont [7/16] 0.0, 128
  %643 = vxpose.xlu0.b32.cont [8/16] 0.0, 128
  %644 = vxpose.xlu0.b32.cont [9/16] 0.0, 128
  %645 = vxpose.xlu0.b32.cont [10/16] 0.0, 128
  %646 = vxpose.xlu0.b32.cont [11/16] 0.0, 128
  %647 = vxpose.xlu0.b32.cont [12/16] 0.0, 128
  %648 = vxpose.xlu0.b32.cont [13/16] 0.0, 128
  %649 = vxpose.xlu0.b32.cont [14/16] 0.0, 128
  %650 = vxpose.xlu0.b32.cont [15/16] 0.0, 128
  %651 = vxpose.xlu0.b32.end [16/16] 0.0, 128
  %v652 = vpop.trf.xlu0
  %v653 = vpop.trf.xlu0
  %v654 = vpop.trf.xlu0
  %v655 = vpop.trf.xlu0
  %v656 = vpop.trf.xlu0
  %v657 = vpop.trf.xlu0
  %v658 = vpop.trf.xlu0
  %v659 = vpop.trf.xlu0
  %v660 = vpop.trf.xlu0
  %v661 = vpop.trf.xlu0
  %v662 = vpop.trf.xlu0
  %v663 = vpop.trf.xlu0
  %v664 = vpop.trf.xlu0
  %v665 = vpop.trf.xlu0
  %v666 = vpop.trf.xlu0
  %v667 = vpop.trf.xlu0
  %v669 = vsel %vm328, %v652, 0
  %v672 = vsel %vm328, %v653, 0
  %674 = vmatprep.subr.mxu0 0.0
  %675 = vmatpush1.msra.mxu0 0.0
  %676 = vmatprep.subr.mxu0 0.0
  %677 = vmatpush1.msra.mxu0 0.0
  %678 = vmatprep.subr.mxu0 0.0
  %679 = vmatpush1.msra.mxu0 0.0
  %680 = vmatprep.subr.mxu0 0.0
  %681 = vmatpush1.msra.mxu0 0.0
  %682 = vmatprep.subr.mxu0 0.0
  %683 = vmatpush1.msra.mxu0 0.0
  %684 = vmatprep.subr.mxu0 0.0
  %685 = vmatpush1.msra.mxu0 0.0
  %686 = vmatprep.subr.mxu0 0.0
  %687 = vmatpush1.msra.mxu0 0.0
  %688 = vmatprep.subr.mxu0 0.0
  %689 = vmatpush1.msra.mxu0 0.0
  %690 = vmatprep.subr.mxu0 0.0
  %691 = vmatpush1.msra.mxu0 0.0
  %692 = vmatprep.subr.mxu0 0.0
  %693 = vmatpush1.msra.mxu0 0.0
  %694 = vmatprep.subr.mxu0 0.0
  %695 = vmatpush1.msra.mxu0 0.0
  %696 = vmatprep.subr.mxu0 0.0
  %697 = vmatpush1.msra.mxu0 0.0
  %698 = vmatprep.subr.mxu0 0.0
  %699 = vmatpush1.msra.mxu0 0.0
  %700 = vmatprep.subr.mxu0 0.0
  %701 = vmatpush1.msra.mxu0 0.0
  %702 = vmatprep.subr.mxu0 0.0
  %703 = vmatpush1.msra.mxu0 0.0
  %704 = vmatprep.subr.mxu0 0.0
  %705 = vmatpush1.msra.mxu0 %v20
  %706 = vmatprep.subr.mxu0 0.0
  %707 = vmatpush2.msra.mxu0 0.0
  %708 = vmatprep.subr.mxu0 0.0
  %709 = vmatpush2.msra.mxu0 0.0
  %710 = vmatprep.subr.mxu0 0.0
  %711 = vmatpush2.msra.mxu0 0.0
  %712 = vmatprep.subr.mxu0 0.0
  %713 = vmatpush2.msra.mxu0 0.0
  %714 = vmatprep.subr.mxu0 0.0
  %715 = vmatpush2.msra.mxu0 0.0
  %716 = vmatprep.subr.mxu0 0.0
  %717 = vmatpush2.msra.mxu0 0.0
  %718 = vmatprep.subr.mxu0 0.0
  %719 = vmatpush2.msra.mxu0 0.0
  %720 = vmatprep.subr.mxu0 0.0
  %721 = vmatpush2.msra.mxu0 0.0
  %722 = vmatprep.subr.mxu0 0.0
  %723 = vmatpush2.msra.mxu0 0.0
  %724 = vmatprep.subr.mxu0 0.0
  %725 = vmatpush2.msra.mxu0 0.0
  %726 = vmatprep.subr.mxu0 0.0
  %727 = vmatpush2.msra.mxu0 0.0
  %728 = vmatprep.subr.mxu0 0.0
  %729 = vmatpush2.msra.mxu0 0.0
  %730 = vmatprep.subr.mxu0 0.0
  %731 = vmatpush2.msra.mxu0 0.0
  %732 = vmatprep.subr.mxu0 0.0
  %733 = vmatpush2.msra.mxu0 0.0
  %734 = vmatprep.subr.mxu0 0.0
  %735 = vmatpush2.msra.mxu0 0.0
  %736 = vmatprep.subr.mxu0 0.0
  %737 = vmatpush2.msra.mxu0 0.0
  %738 = vmatprep.mubr.f32.mxu0 0.0
  %739 = vmatmul.mubr.f32.gmra.mxu0 %v669
  %v740 = vpop.f32.mrf.mxu0
  %v741 = vadd.f32 0.0, %v740
  %v742 = vpop.f32.mrf.mxu0
  %743 = vmatprep.mubr.f32.mxu0 0.0
  %744 = vmatmul.mubr.f32.gmra.mxu0 %v672
  %v745 = vpop.f32.mrf.mxu0
  %v746 = vadd.f32 0.0, %v745
  %v747 = vpop.f32.mrf.mxu0
  %748 = vdwg.mxu0
  %749 = vmatprep.subr.mxu0 0.0
  %750 = vmatpush1.msra.mxu0 0.0
  %751 = vmatprep.subr.mxu0 0.0
  %752 = vmatpush1.msra.mxu0 0.0
  %753 = vmatprep.subr.mxu0 0.0
  %754 = vmatpush1.msra.mxu0 0.0
  %755 = vmatprep.subr.mxu0 0.0
  %756 = vmatpush1.msra.mxu0 0.0
  %757 = vmatprep.subr.mxu0 0.0
  %758 = vmatpush1.msra.mxu0 0.0
  %759 = vmatprep.subr.mxu0 0.0
  %760 = vmatpush1.msra.mxu0 0.0
  %761 = vmatprep.subr.mxu0 0.0
  %762 = vmatpush1.msra.mxu0 0.0
  %763 = vmatprep.subr.mxu0 0.0
  %764 = vmatpush1.msra.mxu0 0.0
  %765 = vmatprep.subr.mxu0 0.0
  %766 = vmatpush1.msra.mxu0 0.0
  %767 = vmatprep.subr.mxu0 0.0
  %768 = vmatpush1.msra.mxu0 0.0
  %769 = vmatprep.subr.mxu0 0.0
  %770 = vmatpush1.msra.mxu0 0.0
  %771 = vmatprep.subr.mxu0 0.0
  %772 = vmatpush1.msra.mxu0 0.0
  %773 = vmatprep.subr.mxu0 0.0
  %774 = vmatpush1.msra.mxu0 0.0
  %775 = vmatprep.subr.mxu0 0.0
  %776 = vmatpush1.msra.mxu0 0.0
  %777 = vmatprep.subr.mxu0 0.0
  %778 = vmatpush1.msra.mxu0 %v746
  %779 = vmatprep.subr.mxu0 0.0
  %780 = vmatpush1.msra.mxu0 %v741
  %781 = vmatprep.subr.mxu0 0.0
  %782 = vmatpush2.msra.mxu0 0.0
  %783 = vmatprep.subr.mxu0 0.0
  %784 = vmatpush2.msra.mxu0 0.0
  %785 = vmatprep.subr.mxu0 0.0
  %786 = vmatpush2.msra.mxu0 0.0
  %787 = vmatprep.subr.mxu0 0.0
  %788 = vmatpush2.msra.mxu0 0.0
  %789 = vmatprep.subr.mxu0 0.0
  %790 = vmatpush2.msra.mxu0 0.0
  %791 = vmatprep.subr.mxu0 0.0
  %792 = vmatpush2.msra.mxu0 0.0
  %793 = vmatprep.subr.mxu0 0.0
  %794 = vmatpush2.msra.mxu0 0.0
  %795 = vmatprep.subr.mxu0 0.0
  %796 = vmatpush2.msra.mxu0 0.0
  %797 = vmatprep.subr.mxu0 0.0
  %798 = vmatpush2.msra.mxu0 0.0
  %799 = vmatprep.subr.mxu0 0.0
  %800 = vmatpush2.msra.mxu0 0.0
  %801 = vmatprep.subr.mxu0 0.0
  %802 = vmatpush2.msra.mxu0 0.0
  %803 = vmatprep.subr.mxu0 0.0
  %804 = vmatpush2.msra.mxu0 0.0
  %805 = vmatprep.subr.mxu0 0.0
  %806 = vmatpush2.msra.mxu0 0.0
  %807 = vmatprep.subr.mxu0 0.0
  %808 = vmatpush2.msra.mxu0 0.0
  %809 = vmatprep.subr.mxu0 0.0
  %810 = vmatpush2.msra.mxu0 0.0
  %811 = vmatprep.subr.mxu0 0.0
  %812 = vmatpush2.msra.mxu0 0.0
  %813 = vmatprep.mubr.f32.mxu0 0.0
  %814 = vmatmul.mubr.f32.gmra.mxu0 %v54
  %v815 = vpop.f32.mrf.mxu0
  %v816 = vadd.f32 0.0, %v815
  %v817 = vpop.f32.mrf.mxu0
  %818 = vmatprep.mubr.f32.mxu0 0.0
  %819 = vmatmul.mubr.f32.gmra.mxu0 %v57
  %v820 = vpop.f32.mrf.mxu0
  %v821 = vadd.f32 0.0, %v820
  %v822 = vpop.f32.mrf.mxu0
  %823 = vdwg.mxu0
  %v824 = vlaneseq
  %v825 = vshrl.u32 %v824, 7
  %v826 = vsub.s32 0, %v825
  %v827 = vrot.slane %v21, %v826
  %v828 = vadd.f32 %v477, %v827
  %v829 = vadd.f32 %v482, %v827
  %v830 = vadd.f32 %v816, %v827
  %v831 = vadd.f32 %v821, %v827
  %v832 = vmul.f32 %v828, 0.5
  %v833 = vmul.f32 %v829, 0.5
  %v834 = vmul.f32 %v830, 0.5
  %v835 = vmul.f32 %v831, 0.5
  %v836 = vrcp.pop 1.4142135
  %v837 = vmul.f32 %v828, %v836
  %v838 = vmul.f32 %v829, %v836
  %v839 = vmul.f32 %v830, %v836
  %v840 = vmul.f32 %v831, %v836
  %v841 = verf.f32.pop %v837
  %v842 = verf.f32.pop %v838
  %v843 = verf.f32.pop %v839
  %v844 = verf.f32.pop %v840
  %v845 = vadd.f32 %v841, 1.0
  %v846 = vadd.f32 %v842, 1.0
  %v847 = vadd.f32 %v843, 1.0
  %v848 = vadd.f32 %v844, 1.0
  %v849 = vmul.f32 %v832, %v845
  %v850 = vmul.f32 %v833, %v846
  %v851 = vmul.f32 %v834, %v847
  %v852 = vmul.f32 %v835, %v848
  %v853 = vlaneseq
  %v854 = vshrl.u32 %v853, 7
  %v855 = vsub.s32 1, %v854
  %v856 = vrot.slane %v21, %v855
  %vm857 = vcmask 523264
  %v859 = vsel %vm857, %v849, 0
  %v862 = vsel %vm857, %v850, 0
  %v865 = vsel %vm857, %v851, 0
  %v868 = vsel %vm857, %v852, 0
  %870 = vmatprep.subr.mxu0 0.0
  %871 = vmatpush1.msra.mxu0 0.0
  %872 = vmatprep.subr.mxu0 0.0
  %873 = vmatpush1.msra.mxu0 0.0
  %874 = vmatprep.subr.mxu0 0.0
  %875 = vmatpush1.msra.mxu0 0.0
  %876 = vmatprep.subr.mxu0 0.0
  %877 = vmatpush1.msra.mxu0 0.0
  %878 = vmatprep.subr.mxu0 0.0
  %879 = vmatpush1.msra.mxu0 0.0
  %880 = vmatprep.subr.mxu0 0.0
  %881 = vmatpush1.msra.mxu0 0.0
  %882 = vmatprep.subr.mxu0 0.0
  %883 = vmatpush1.msra.mxu0 0.0
  %884 = vmatprep.subr.mxu0 0.0
  %885 = vmatpush1.msra.mxu0 0.0
  %886 = vmatprep.subr.mxu0 0.0
  %887 = vmatpush1.msra.mxu0 %v29
  %888 = vmatprep.subr.mxu0 0.0
  %889 = vmatpush1.msra.mxu0 %v28
  %890 = vmatprep.subr.mxu0 0.0
  %891 = vmatpush1.msra.mxu0 %v27
  %892 = vmatprep.subr.mxu0 0.0
  %893 = vmatpush1.msra.mxu0 %v26
  %894 = vmatprep.subr.mxu0 0.0
  %895 = vmatpush1.msra.mxu0 %v25
  %896 = vmatprep.subr.mxu0 0.0
  %897 = vmatpush1.msra.mxu0 %v24
  %898 = vmatprep.subr.mxu0 0.0
  %899 = vmatpush1.msra.mxu0 %v23
  %900 = vmatprep.subr.mxu0 0.0
  %901 = vmatpush1.msra.mxu0 %v22
  %902 = vmatprep.subr.mxu0 0.0
  %903 = vmatpush2.msra.mxu0 0.0
  %904 = vmatprep.subr.mxu0 0.0
  %905 = vmatpush2.msra.mxu0 0.0
  %906 = vmatprep.subr.mxu0 0.0
  %907 = vmatpush2.msra.mxu0 0.0
  %908 = vmatprep.subr.mxu0 0.0
  %909 = vmatpush2.msra.mxu0 0.0
  %910 = vmatprep.subr.mxu0 0.0
  %911 = vmatpush2.msra.mxu0 0.0
  %912 = vmatprep.subr.mxu0 0.0
  %913 = vmatpush2.msra.mxu0 0.0
  %914 = vmatprep.subr.mxu0 0.0
  %915 = vmatpush2.msra.mxu0 0.0
  %916 = vmatprep.subr.mxu0 0.0
  %917 = vmatpush2.msra.mxu0 0.0
  %918 = vmatprep.subr.mxu0 0.0
  %919 = vmatpush2.msra.mxu0 0.0
  %920 = vmatprep.subr.mxu0 0.0
  %921 = vmatpush2.msra.mxu0 0.0
  %922 = vmatprep.subr.mxu0 0.0
  %923 = vmatpush2.msra.mxu0 0.0
  %924 = vmatprep.subr.mxu0 0.0
  %925 = vmatpush2.msra.mxu0 0.0
  %926 = vmatprep.subr.mxu0 0.0
  %927 = vmatpush2.msra.mxu0 0.0
  %928 = vmatprep.subr.mxu0 0.0
  %929 = vmatpush2.msra.mxu0 0.0
  %930 = vmatprep.subr.mxu0 0.0
  %931 = vmatpush2.msra.mxu0 0.0
  %932 = vmatprep.subr.mxu0 0.0
  %933 = vmatpush2.msra.mxu0 0.0
  %934 = vmatprep.mubr.f32.mxu0 0.0
  %935 = vmatmul.mubr.f32.gmra.mxu0 %v859
  %v936 = vpop.f32.mrf.mxu0
  %v937 = vadd.f32 %v856, %v936
  %v938 = vpop.f32.mrf.mxu0
  %939 = vmatprep.mubr.f32.mxu0 0.0
  %940 = vmatmul.mubr.f32.gmra.mxu0 %v862
  %v941 = vpop.f32.mrf.mxu0
  %v942 = vadd.f32 %v856, %v941
  %v943 = vpop.f32.mrf.mxu0
  %944 = vmatprep.mubr.f32.mxu0 0.0
  %945 = vmatmul.mubr.f32.gmra.mxu0 %v865
  %v946 = vpop.f32.mrf.mxu0
  %v947 = vadd.f32 %v856, %v946
  %v948 = vpop.f32.mrf.mxu0
  %949 = vmatprep.mubr.f32.mxu0 0.0
  %950 = vmatmul.mubr.f32.gmra.mxu0 %v868
  %v951 = vpop.f32.mrf.mxu0
  %v952 = vadd.f32 %v856, %v951
  %v953 = vpop.f32.mrf.mxu0
  %954 = vdwg.mxu0
  %v955 = vmul.f32 %v937, 0.5
  %v956 = vmul.f32 %v942, 0.5
  %v957 = vmul.f32 %v947, 0.5
  %v958 = vmul.f32 %v952, 0.5
  %v959 = vmul.f32 %v937, %v836
  %v960 = vmul.f32 %v942, %v836
  %v961 = vmul.f32 %v947, %v836
  %v962 = vmul.f32 %v952, %v836
  %v963 = verf.f32.pop %v959
  %v964 = verf.f32.pop %v960
  %v965 = verf.f32.pop %v961
  %v966 = verf.f32.pop %v962
  %v967 = vadd.f32 %v963, 1.0
  %v968 = vadd.f32 %v964, 1.0
  %v969 = vadd.f32 %v965, 1.0
  %v970 = vadd.f32 %v966, 1.0
  %v971 = vmul.f32 %v955, %v967
  %v972 = vmul.f32 %v956, %v968
  %v973 = vmul.f32 %v957, %v969
  %v974 = vmul.f32 %v958, %v970
  %v975 = vlaneseq
  %v976 = vshrl.u32 %v975, 7
  %v977 = vsub.s32 2, %v976
  %v978 = vrot.slane %v21, %v977
  %979 = vmatprep.subr.mxu0 0.0
  %980 = vmatpush1.msra.mxu0 %v45
  %981 = vmatprep.subr.mxu0 0.0
  %982 = vmatpush1.msra.mxu0 %v44
  %983 = vmatprep.subr.mxu0 0.0
  %984 = vmatpush1.msra.mxu0 %v43
  %985 = vmatprep.subr.mxu0 0.0
  %986 = vmatpush1.msra.mxu0 %v42
  %987 = vmatprep.subr.mxu0 0.0
  %988 = vmatpush1.msra.mxu0 %v41
  %989 = vmatprep.subr.mxu0 0.0
  %990 = vmatpush1.msra.mxu0 %v40
  %991 = vmatprep.subr.mxu0 0.0
  %992 = vmatpush1.msra.mxu0 %v39
  %993 = vmatprep.subr.mxu0 0.0
  %994 = vmatpush1.msra.mxu0 %v38
  %995 = vmatprep.subr.mxu0 0.0
  %996 = vmatpush1.msra.mxu0 %v37
  %997 = vmatprep.subr.mxu0 0.0
  %998 = vmatpush1.msra.mxu0 %v36
  %999 = vmatprep.subr.mxu0 0.0
  %1000 = vmatpush1.msra.mxu0 %v35
  %1001 = vmatprep.subr.mxu0 0.0
  %1002 = vmatpush1.msra.mxu0 %v34
  %1003 = vmatprep.subr.mxu0 0.0
  %1004 = vmatpush1.msra.mxu0 %v33
  %1005 = vmatprep.subr.mxu0 0.0
  %1006 = vmatpush1.msra.mxu0 %v32
  %1007 = vmatprep.subr.mxu0 0.0
  %1008 = vmatpush1.msra.mxu0 %v31
  %1009 = vmatprep.subr.mxu0 0.0
  %1010 = vmatpush1.msra.mxu0 %v30
  %1011 = vmatprep.subr.mxu0 0.0
  %1012 = vmatpush2.msra.mxu0 0.0
  %1013 = vmatprep.subr.mxu0 0.0
  %1014 = vmatpush2.msra.mxu0 0.0
  %1015 = vmatprep.subr.mxu0 0.0
  %1016 = vmatpush2.msra.mxu0 0.0
  %1017 = vmatprep.subr.mxu0 0.0
  %1018 = vmatpush2.msra.mxu0 0.0
  %1019 = vmatprep.subr.mxu0 0.0
  %1020 = vmatpush2.msra.mxu0 0.0
  %1021 = vmatprep.subr.mxu0 0.0
  %1022 = vmatpush2.msra.mxu0 0.0
  %1023 = vmatprep.subr.mxu0 0.0
  %1024 = vmatpush2.msra.mxu0 0.0
  %1025 = vmatprep.subr.mxu0 0.0
  %1026 = vmatpush2.msra.mxu0 0.0
  %1027 = vmatprep.subr.mxu0 0.0
  %1028 = vmatpush2.msra.mxu0 0.0
  %1029 = vmatprep.subr.mxu0 0.0
  %1030 = vmatpush2.msra.mxu0 0.0
  %1031 = vmatprep.subr.mxu0 0.0
  %1032 = vmatpush2.msra.mxu0 0.0
  %1033 = vmatprep.subr.mxu0 0.0
  %1034 = vmatpush2.msra.mxu0 0.0
  %1035 = vmatprep.subr.mxu0 0.0
  %1036 = vmatpush2.msra.mxu0 0.0
  %1037 = vmatprep.subr.mxu0 0.0
  %1038 = vmatpush2.msra.mxu0 0.0
  %1039 = vmatprep.subr.mxu0 0.0
  %1040 = vmatpush2.msra.mxu0 0.0
  %1041 = vmatprep.subr.mxu0 0.0
  %1042 = vmatpush2.msra.mxu0 0.0
  %1043 = vmatprep.mubr.f32.mxu0 0.0
  %1044 = vmatmul.mubr.f32.gmra.mxu0 %v971
  %v1045 = vpop.f32.mrf.mxu0
  %v1046 = vadd.f32 %v978, %v1045
  %v1047 = vpop.f32.mrf.mxu0
  %1048 = vmatprep.mubr.f32.mxu0 0.0
  %1049 = vmatmul.mubr.f32.gmra.mxu0 %v972
  %v1050 = vpop.f32.mrf.mxu0
  %v1051 = vadd.f32 %v978, %v1050
  %v1052 = vpop.f32.mrf.mxu0
  %1053 = vmatprep.mubr.f32.mxu0 0.0
  %1054 = vmatmul.mubr.f32.gmra.mxu0 %v973
  %v1055 = vpop.f32.mrf.mxu0
  %v1056 = vadd.f32 %v978, %v1055
  %v1057 = vpop.f32.mrf.mxu0
  %1058 = vmatprep.mubr.f32.mxu0 0.0
  %1059 = vmatmul.mubr.f32.gmra.mxu0 %v974
  %v1060 = vpop.f32.mrf.mxu0
  %v1061 = vadd.f32 %v978, %v1060
  %v1062 = vpop.f32.mrf.mxu0
  %1063 = vdwg.mxu0
  %v1064 = vsel %vm46, %v295, 0.0
  %v1065 = vsel %vm46, %v635, 0.0
  %1066 = vst [vmem:[%s3] sm:$0xff] %v1046
  %1067 = vst [vmem:[%s3 + $0x8] sm:$0xff] %v1051
  %1068 = vst [vmem:[%s3 + $0x10] sm:$0xff] %v1056
  %1069 = vst [vmem:[%s3 + $0x18] sm:$0xff] %v1061
  %1070 = vst [vmem:[%s3 + $0x20] sm:$0xff] %v1064
  %1071 = vst [vmem:[%s3 + $0x28] sm:$0xff] %v1065
  // Predicated region
  $region14: #{spectral_filter_forward.1} parent=0 // pred_check
    _
  $region15: #{spectral_filter_forward.1} parent=0 // pred_check_branch
    %1073 = sbr.rel (0) target = $region17
  $region16: #{spectral_filter_forward.1} parent=0 // pred_region
    _
  $region17: #{spectral_filter_forward.1} parent=0 // pred_fallthru
    _
  // Predicated region
  $region18: #{spectral_filter_forward.1} parent=0 // pred_check
    _
  $region19: #{spectral_filter_forward.1} parent=0 // pred_check_branch
    %1075 = sbr.rel (0) target = $region21
  $region20: #{spectral_filter_forward.1} parent=0 // pred_region
    _
  $region21: #{spectral_filter_forward.1} parent=0 // pred_fallthru
    _

</llo_original>
